<compile_context>
chip_gen: v7x
topology: tpu7x:2x2x1
jax: 0.10.0
libtpu: 0.0.40
codegen_flags: <defaults>
</compile_context>

<pallas_src>
import math

import jax
import jax.numpy as jnp
from jax.experimental import pallas as pl
from jax.experimental.pallas import tpu as pltpu


def _round_up(n, m):
    return ((n + m - 1) // m) * m


def _mlp_kernel(x_ref, w1_ref, b1_ref, w2_ref, b2_ref, w3_ref, b3_ref, o_ref):
    # Feature-major: activations are (features, batch_tile), batch on lanes.
    x = x_ref[...]            # (3, TB)   lane-dense rows
    w1 = w1_ref[...]          # (128, 3)  PyTorch (out, in) layout

    # Layer 1 (fan_in = 3): three rank-1 VPU FMAs over lane-dense batch rows
    # instead of a (128,3)x(3,TB) MXU dot with a 3-deep contraction.
    h1 = (w1[:, 0:1] * x[0:1, :]
          + w1[:, 1:2] * x[1:2, :]
          + w1[:, 2:3] * x[2:3, :]
          + b1_ref[...])                                      # (128, TB)
    h1 = jnp.maximum(h1, 0.0)

    # Layer 2: 128x128 MXU matmul, f32 accumulate.  If w2 was pre-cast to
    # bf16 in the wrapper, h1 is cast to match (full MXU rate on v6e/v7x).
    h2 = jnp.dot(w2_ref[...], h1.astype(w2_ref.dtype),
                 preferred_element_type=jnp.float32) + b2_ref[...]
    h2 = jnp.maximum(h2, 0.0)                                 # (128, TB)

    # Layer 3: w3/b3 are zero-padded to 128 output features so the result and
    # the store are fully lane/sublane-dense (valid rows are 0..1).
    out = jnp.dot(w3_ref[...], h2,
                  preferred_element_type=jnp.float32) + b3_ref[...]
    o_ref[...] = out.astype(o_ref.dtype)                      # (128, TB)


def net_forward(x, params, *, tile_b=2048, use_bf16_matmul=False):
    """Forward pass of Net: relu(fc1) -> relu(fc2) -> fc3.

    x: (B, 3) float32
    params: dict with PyTorch-layout weights:
        w1 (128, 3), b1 (128, 1), w2 (128, 128), b2 (128, 1),
        w3 (2, 128),  b3 (2, 1)
    returns: (B, 2) float32
    """
    B = x.shape[0]

    # --- Tile-size / grid selection -------------------------------------
    tile_b = max(128, _round_up(tile_b, 128))     # batch is the lane axis
    bp = _round_up(B, 128)
    num_steps = -(-bp // tile_b)
    if num_steps == 1 and B > 256:
        # Give the second TensorCore of a v7x megacore its own tile.
        num_steps = 2
    tb = _round_up(-(-bp // num_steps), 128)
    b_pad = num_steps * tb

    # --- Wrapper-side layout plumbing (cheap XLA ops) --------------------
    # Feature-major, lane-dense input: (3, b_pad).
    x_t = jnp.pad(x.T, ((0, 0), (0, b_pad - B)))

    # Zero-pad fc3 to 128 output features so the kernel output is lane-dense.
    w3p = jnp.zeros((128, 128), jnp.float32).at[:2, :].set(params["w3"])
    b3p = jnp.zeros((128, 1), jnp.float32).at[:2, :].set(params["b3"])

    w2 = params["w2"].astype(jnp.bfloat16) if use_bf16_matmul else params["w2"]

    grid = (num_steps,)

    # Weights/biases: full-array blocks with a constant index_map stay
    # VMEM-resident across grid steps (no re-DMA per tile).
    def resident(shape):
        return pl.BlockSpec(shape, lambda i: (0, 0))

    cost = pl.CostEstimate(
        flops=2 * b_pad * (3 * 128 + 128 * 128 + 128 * 128),
        transcendentals=0,
        bytes_accessed=4 * (3 * b_pad + 128 * b_pad
                            + 128 * 3 + 128 + 128 * 128 + 128
                            + 128 * 128 + 128),
    )

    out_t = pl.pallas_call(
        _mlp_kernel,
        out_shape=jax.ShapeDtypeStruct((128, b_pad), jnp.float32),
        grid=grid,
        in_specs=[
            pl.BlockSpec((3, tb), lambda i: (0, i)),     # x tile (feature-major)
            resident((128, 3)),                          # w1
            resident((128, 1)),                          # b1
            resident((128, 128)),                        # w2
            resident((128, 1)),                          # b2
            resident((128, 128)),                        # w3 (zero-padded)
            resident((128, 1)),                          # b3 (zero-padded)
        ],
        out_specs=pl.BlockSpec((128, tb), lambda i: (0, i)),
        compiler_params=pltpu.CompilerParams(
            dimension_semantics=("parallel",),
        ),
        cost_estimate=cost,
    )(
        x_t,
        params["w1"], params["b1"],
        w2, params["b2"],
        w3p, b3p,
    )

    # Valid output features are rows 0..1; valid batch is the first B lanes.
    return out_t[:2, :B].T


def init_params(key):
    """PyTorch nn.Linear default init (U[-1/sqrt(fan_in), 1/sqrt(fan_in)]),
    stored in PyTorch (out_features, in_features) layout."""
    keys = jax.random.split(key, 6)

    def linear(kw, kb, fan_in, fan_out):
        bound = 1.0 / math.sqrt(fan_in)
        w = jax.random.uniform(kw, (fan_out, fan_in), jnp.float32, -bound, bound)
        b = jax.random.uniform(kb, (fan_out, 1), jnp.float32, -bound, bound)
        return w, b

    w1, b1 = linear(keys[0], keys[1], 3, 128)
    w2, b2 = linear(keys[2], keys[3], 128, 128)
    w3, b3 = linear(keys[4], keys[5], 128, 2)
    return {"w1": w1, "b1": b1, "w2": w2, "b2": b2, "w3": w3, "b3": b3}


def net_forward_ref(x, p):
    """Pure-JAX reference for correctness checking."""
    h1 = jnp.maximum(x @ p["w1"].T + p["b1"].T, 0.0)
    h2 = jnp.maximum(h1 @ p["w2"].T + p["b2"].T, 0.0)
    return h2 @ p["w3"].T + p["b3"].T


if __name__ == "__main__":
    key = jax.random.PRNGKey(0)
    k_params, k_x1, k_x2, k_x3 = jax.random.split(key, 4)

    params = init_params(k_params)

    # Tiny batch of system-state vectors -> single grid step.
    x_small = jax.random.normal(k_x1, (8, 3), dtype=jnp.float32)
    out_small = jax.block_until_ready(net_forward(x_small, params))
    ref_small = net_forward_ref(x_small, params)
    assert out_small.shape == (8, 2)
    assert jnp.allclose(out_small, ref_small, atol=1e-4, rtol=1e-4)

    # Non-multiple-of-tile batch with a deliberately small tile -> multi-step
    # grid, resident weights, padding + slice.
    x_mid = jax.random.normal(k_x2, (300, 3), dtype=jnp.float32)
    out_mid = jax.block_until_ready(net_forward(x_mid, params, tile_b=128))
    ref_mid = net_forward_ref(x_mid, params)
    assert out_mid.shape == (300, 2)
    assert jnp.allclose(out_mid, ref_mid, atol=1e-4, rtol=1e-4)

    # Medium batch -> 2-step grid via the megacore heuristic; also exercise
    # the optional bf16 MXU path (looser tolerance).
    x_big = jax.random.normal(k_x3, (1000, 3), dtype=jnp.float32)
    out_big = jax.block_until_ready(net_forward(x_big, params))
    ref_big = net_forward_ref(x_big, params)
    assert out_big.shape == (1000, 2)
    assert jnp.allclose(out_big, ref_big, atol=1e-4, rtol=1e-4)

    out_bf16 = jax.block_until_ready(
        net_forward(x_big, params, use_bf16_matmul=True))
    assert jnp.allclose(out_bf16, ref_big, atol=1e-1, rtol=1e-1)

    print("KERNEL_OK")
</pallas_src>

<mosaic_0001>
module attributes {stable_mosaic.version = 11 : i64} {
  func.func @_mlp_kernel(%arg0: i32, %arg1: memref<3x128xf32, #tpu.memory_space<vmem>>, %arg2: memref<128x3xf32, #tpu.memory_space<vmem>>, %arg3: memref<128x1xf32, #tpu.memory_space<vmem>>, %arg4: memref<128x128xf32, #tpu.memory_space<vmem>>, %arg5: memref<128x1xf32, #tpu.memory_space<vmem>>, %arg6: memref<128x128xf32, #tpu.memory_space<vmem>>, %arg7: memref<128x1xf32, #tpu.memory_space<vmem>>, %arg8: memref<128x128xf32, #tpu.memory_space<vmem>>) attributes {dimension_semantics = [#tpu.dimension_semantics<parallel>], iteration_bounds = array<i64: 1>, scalar_prefetch = 0 : i64, scratch_operands = 0 : i64, tpu.core_type = #tpu.core_type<tc>, window_params = [{transform_indices = @transform_0, window_bounds = array<i64: 3, 128>}, {pipeline_mode = #tpu.pipeline_mode<synchronous>, transform_indices = @transform_1, window_bounds = array<i64: 128, 3>}, {pipeline_mode = #tpu.pipeline_mode<synchronous>, transform_indices = @transform_2, window_bounds = array<i64: 128, 1>}, {pipeline_mode = #tpu.pipeline_mode<synchronous>, transform_indices = @transform_3, window_bounds = array<i64: 128, 128>}, {pipeline_mode = #tpu.pipeline_mode<synchronous>, transform_indices = @transform_4, window_bounds = array<i64: 128, 1>}, {pipeline_mode = #tpu.pipeline_mode<synchronous>, transform_indices = @transform_5, window_bounds = array<i64: 128, 128>}, {pipeline_mode = #tpu.pipeline_mode<synchronous>, transform_indices = @transform_6, window_bounds = array<i64: 128, 1>}, {transform_indices = @transform_7, window_bounds = array<i64: 128, 128>}]} {
    %c0 = arith.constant 0 : index
    %c0_0 = arith.constant 0 : index
    %0 = vector.load %arg1[%c0, %c0_0] : memref<3x128xf32, #tpu.memory_space<vmem>>, vector<3x128xf32>
    %c0_1 = arith.constant 0 : index
    %c0_2 = arith.constant 0 : index
    %1 = vector.load %arg2[%c0_1, %c0_2] : memref<128x3xf32, #tpu.memory_space<vmem>>, vector<128x3xf32>
    %2 = vector.extract_strided_slice %1 {offsets = [0, 0], sizes = [128, 1], strides = [1, 1]} : vector<128x3xf32> to vector<128x1xf32>
    %3 = vector.extract_strided_slice %0 {offsets = [0, 0], sizes = [1, 128], strides = [1, 1]} : vector<3x128xf32> to vector<1x128xf32>
    %4 = vector.broadcast %2 : vector<128x1xf32> to vector<128x128xf32>
    %5 = vector.broadcast %3 : vector<1x128xf32> to vector<128x128xf32>
    %6 = arith.mulf %4, %5 : vector<128x128xf32>
    %7 = vector.extract_strided_slice %1 {offsets = [0, 1], sizes = [128, 1], strides = [1, 1]} : vector<128x3xf32> to vector<128x1xf32>
    %8 = vector.extract_strided_slice %0 {offsets = [1, 0], sizes = [1, 128], strides = [1, 1]} : vector<3x128xf32> to vector<1x128xf32>
    %9 = vector.broadcast %7 : vector<128x1xf32> to vector<128x128xf32>
    %10 = vector.broadcast %8 : vector<1x128xf32> to vector<128x128xf32>
    %11 = arith.mulf %9, %10 : vector<128x128xf32>
    %12 = arith.addf %6, %11 : vector<128x128xf32>
    %13 = vector.extract_strided_slice %1 {offsets = [0, 2], sizes = [128, 1], strides = [1, 1]} : vector<128x3xf32> to vector<128x1xf32>
    %14 = vector.extract_strided_slice %0 {offsets = [2, 0], sizes = [1, 128], strides = [1, 1]} : vector<3x128xf32> to vector<1x128xf32>
    %15 = vector.broadcast %13 : vector<128x1xf32> to vector<128x128xf32>
    %16 = vector.broadcast %14 : vector<1x128xf32> to vector<128x128xf32>
    %17 = arith.mulf %15, %16 : vector<128x128xf32>
    %18 = arith.addf %12, %17 : vector<128x128xf32>
    %c0_3 = arith.constant 0 : index
    %c0_4 = arith.constant 0 : index
    %19 = vector.load %arg3[%c0_3, %c0_4] : memref<128x1xf32, #tpu.memory_space<vmem>>, vector<128x1xf32>
    %20 = vector.broadcast %19 : vector<128x1xf32> to vector<128x128xf32>
    %21 = arith.addf %18, %20 : vector<128x128xf32>
    %cst = arith.constant 0.000000e+00 : f32
    %22 = vector.broadcast %cst : f32 to vector<128x128xf32>
    %23 = arith.maximumf %21, %22 : vector<128x128xf32>
    %c0_5 = arith.constant 0 : index
    %c0_6 = arith.constant 0 : index
    %24 = vector.load %arg4[%c0_5, %c0_6] : memref<128x128xf32, #tpu.memory_space<vmem>>, vector<128x128xf32>
    %cst_7 = arith.constant dense<0.000000e+00> : vector<128x128xf32>
    %25 = tpu.matmul %24, %23, %cst_7 {dimension_numbers = #tpu.dot_dimension_numbers<[1], [0], [0], [1], [0, 0, 1, 1], [], []>} : vector<128x128xf32>, vector<128x128xf32>, vector<128x128xf32> -> vector<128x128xf32>
    %c0_8 = arith.constant 0 : index
    %c0_9 = arith.constant 0 : index
    %26 = vector.load %arg5[%c0_8, %c0_9] : memref<128x1xf32, #tpu.memory_space<vmem>>, vector<128x1xf32>
    %27 = vector.broadcast %26 : vector<128x1xf32> to vector<128x128xf32>
    %28 = arith.addf %25, %27 : vector<128x128xf32>
    %cst_10 = arith.constant 0.000000e+00 : f32
    %29 = vector.broadcast %cst_10 : f32 to vector<128x128xf32>
    %30 = arith.maximumf %28, %29 : vector<128x128xf32>
    %c0_11 = arith.constant 0 : index
    %c0_12 = arith.constant 0 : index
    %31 = vector.load %arg6[%c0_11, %c0_12] : memref<128x128xf32, #tpu.memory_space<vmem>>, vector<128x128xf32>
    %cst_13 = arith.constant dense<0.000000e+00> : vector<128x128xf32>
    %32 = tpu.matmul %31, %30, %cst_13 {dimension_numbers = #tpu.dot_dimension_numbers<[1], [0], [0], [1], [0, 0, 1, 1], [], []>} : vector<128x128xf32>, vector<128x128xf32>, vector<128x128xf32> -> vector<128x128xf32>
    %c0_14 = arith.constant 0 : index
    %c0_15 = arith.constant 0 : index
    %33 = vector.load %arg7[%c0_14, %c0_15] : memref<128x1xf32, #tpu.memory_space<vmem>>, vector<128x1xf32>
    %34 = vector.broadcast %33 : vector<128x1xf32> to vector<128x128xf32>
    %35 = arith.addf %32, %34 : vector<128x128xf32>
    %c0_16 = arith.constant 0 : index
    %c0_17 = arith.constant 0 : index
    %36 = vector.load %arg8[%c0_16, %c0_17] : memref<128x128xf32, #tpu.memory_space<vmem>>, vector<128x128xf32>
    tpu.vector_store %arg8[%c0_16, %c0_17], %35 {strides = array<i32>} : memref<128x128xf32, #tpu.memory_space<vmem>>, vector<128x128xf32>,
    return
  }
  func.func @transform_0(%arg0: i32) -> (i32, i32) {
    %c0_i32 = arith.constant 0 : i32
    %c0_i32_0 = arith.constant 0 : i32
    return %c0_i32, %arg0 : i32, i32
  }
  func.func @transform_1(%arg0: i32) -> (i32, i32) {
    %c0_i32 = arith.constant 0 : i32
    %c0_i32_0 = arith.constant 0 : i32
    %c0_i32_1 = arith.constant 0 : i32
    return %c0_i32, %c0_i32_0 : i32, i32
  }
  func.func @transform_2(%arg0: i32) -> (i32, i32) {
    %c0_i32 = arith.constant 0 : i32
    %c0_i32_0 = arith.constant 0 : i32
    %c0_i32_1 = arith.constant 0 : i32
    return %c0_i32, %c0_i32_0 : i32, i32
  }
  func.func @transform_3(%arg0: i32) -> (i32, i32) {
    %c0_i32 = arith.constant 0 : i32
    %c0_i32_0 = arith.constant 0 : i32
    %c0_i32_1 = arith.constant 0 : i32
    return %c0_i32, %c0_i32_0 : i32, i32
  }
  func.func @transform_4(%arg0: i32) -> (i32, i32) {
    %c0_i32 = arith.constant 0 : i32
    %c0_i32_0 = arith.constant 0 : i32
    %c0_i32_1 = arith.constant 0 : i32
    return %c0_i32, %c0_i32_0 : i32, i32
  }
  func.func @transform_5(%arg0: i32) -> (i32, i32) {
    %c0_i32 = arith.constant 0 : i32
    %c0_i32_0 = arith.constant 0 : i32
    %c0_i32_1 = arith.constant 0 : i32
    return %c0_i32, %c0_i32_0 : i32, i32
  }
  func.func @transform_6(%arg0: i32) -> (i32, i32) {
    %c0_i32 = arith.constant 0 : i32
    %c0_i32_0 = arith.constant 0 : i32
    %c0_i32_1 = arith.constant 0 : i32
    return %c0_i32, %c0_i32_0 : i32, i32
  }
  func.func @transform_7(%arg0: i32) -> (i32, i32) {
    %c0_i32 = arith.constant 0 : i32
    %c0_i32_0 = arith.constant 0 : i32
    return %c0_i32, %arg0 : i32, i32
  }
}

</mosaic_0001>

<llo_original>
// kernel: tpu_custom_call.1
$region0: #{tpu_custom_call.1}
  #allocation0 [shape = 'u32[]', space=smem, size = 0x4, offset = 0x4, fixed_abs, tag = 'smem constant byte address 0x4 - core index']
  #allocation1 [shape = 'u32[144,128]{1,0:T(1,128)}', space=vmem, size = 0x12000, scoped, tag = 'internal scratch']
  %s0 = inlined_call_operand.vmem [shape: f32[3,128], index: 0, kind: input, shape index: {}]
  %s1 = inlined_call_operand.vmem [shape: f32[128,3], index: 1, kind: input, shape index: {}]
  %s2 = inlined_call_operand.vmem [shape: f32[128,1], index: 2, kind: input, shape index: {}]
  %s3 = inlined_call_operand.vmem [shape: f32[128,128], index: 3, kind: input, shape index: {}]
  %s4 = inlined_call_operand.vmem [shape: f32[128,1], index: 4, kind: input, shape index: {}]
  %s5 = inlined_call_operand.vmem [shape: f32[128,128], index: 5, kind: input, shape index: {}]
  %s6 = inlined_call_operand.vmem [shape: f32[128,1], index: 6, kind: input, shape index: {}]
  %s7 = inlined_call_operand.hbm [shape: f32[128,128], index: 7, kind: output, shape index: {}]
  %s8 = sld [smem:[#allocation0]]
  $region38: #{tpu_custom_call.1} parent=0
    _
  %s10 = ssub.s32 1, %s8
  %s11 = scalar_select 0, %s10, %s8
  $region1: #{tpu_custom_call.1} parent=0
    #allocation2 [shape = 'u8[65536]{0}', space=vmem, size = 0x10000, scoped, tag = 'output window, operand 0, single buffered']
    #allocation3 [shape = 's32[1]{0}', space=sflag, size = 0x4, scoped, tag = 'scoped memory for tpu_custom_call.1']
    %12 = vsyncpa [#allocation3], 0
    // Predicated region
    $region2: #{tpu_custom_call.1} parent=1 // pred_check
      _
    $region3: #{tpu_custom_call.1} parent=1 // pred_check_branch
      %14 = sbr.rel (0) target = $region5
    $region4: #{tpu_custom_call.1} parent=1 // pred_region
      _
    $region5: #{tpu_custom_call.1} parent=1 // pred_fallthru
      _
    // Predicated region
    $region6: #{tpu_custom_call.1} parent=1 // pred_check
      _
    $region7: #{tpu_custom_call.1} parent=1 // pred_check_branch
      %16 = sbr.rel (0) target = $region9
    $region8: #{tpu_custom_call.1} parent=1 // pred_region
      _
    $region9: #{tpu_custom_call.1} parent=1 // pred_fallthru
      _
    // Predicated region
    $region10: #{tpu_custom_call.1} parent=1 // pred_check
      _
    $region11: #{tpu_custom_call.1} parent=1 // pred_check_branch
      %18 = sbr.rel (0) target = $region13
    $region12: #{tpu_custom_call.1} parent=1 // pred_region
      _
    $region13: #{tpu_custom_call.1} parent=1 // pred_fallthru
      _
    // Predicated region
    $region14: #{tpu_custom_call.1} parent=1 // pred_check
      _
    $region15: #{tpu_custom_call.1} parent=1 // pred_check_branch
      %20 = sbr.rel (0) target = $region17
    $region16: #{tpu_custom_call.1} parent=1 // pred_region
      _
    $region17: #{tpu_custom_call.1} parent=1 // pred_fallthru
      _
    // Predicated region
    $region18: #{tpu_custom_call.1} parent=1 // pred_check
      _
    $region19: #{tpu_custom_call.1} parent=1 // pred_check_branch
      %22 = sbr.rel (0) target = $region21
    $region20: #{tpu_custom_call.1} parent=1 // pred_region
      _
    $region21: #{tpu_custom_call.1} parent=1 // pred_fallthru
      _
    // Predicated region
    $region22: #{tpu_custom_call.1} parent=1 // pred_check
      _
    $region23: #{tpu_custom_call.1} parent=1 // pred_check_branch
      %24 = sbr.rel (0) target = $region25
    $region24: #{tpu_custom_call.1} parent=1 // pred_region
      _
    $region25: #{tpu_custom_call.1} parent=1 // pred_fallthru
      _
    // Predicated region
    $region26: #{tpu_custom_call.1} parent=1 // pred_check
      _
    $region27: #{tpu_custom_call.1} parent=1 // pred_check_branch
      %26 = sbr.rel (0) target = $region29
    $region28: #{tpu_custom_call.1} parent=1 // pred_region
      _
    $region29: #{tpu_custom_call.1} parent=1 // pred_fallthru
      _
    %v27 = vld [vmem:[%s0] sm:$0x7]
    %v28 = vld [vmem:[%s1] sm:$0xff]
    %v29 = vld [vmem:[%s1 + $0x8] sm:$0xff]
    %v30 = vld [vmem:[%s1 + $0x10] sm:$0xff]
    %v31 = vld [vmem:[%s1 + $0x18] sm:$0xff]
    %v32 = vld [vmem:[%s1 + $0x20] sm:$0xff]
    %v33 = vld [vmem:[%s1 + $0x28] sm:$0xff]
    %v34 = vld [vmem:[%s1 + $0x30] sm:$0xff]
    %v35 = vld [vmem:[%s1 + $0x38] sm:$0xff]
    %v36 = vld [vmem:[%s1 + $0x40] sm:$0xff]
    %v37 = vld [vmem:[%s1 + $0x48] sm:$0xff]
    %v38 = vld [vmem:[%s1 + $0x50] sm:$0xff]
    %v39 = vld [vmem:[%s1 + $0x58] sm:$0xff]
    %v40 = vld [vmem:[%s1 + $0x60] sm:$0xff]
    %v41 = vld [vmem:[%s1 + $0x68] sm:$0xff]
    %v42 = vld [vmem:[%s1 + $0x70] sm:$0xff]
    %v43 = vld [vmem:[%s1 + $0x78] sm:$0xff]
    %45 = vset.pattern.permute.xlu0 0
    %46 = vperm.xlu0 %45, %v28
    %v47 = vpop.permute.xlu0 %46
    %50 = vset.pattern.permute.xlu0 0
    %51 = vperm.xlu0 %50, %v29
    %v52 = vpop.permute.xlu0 %51
    %55 = vset.pattern.permute.xlu0 0
    %56 = vperm.xlu0 %55, %v30
    %v57 = vpop.permute.xlu0 %56
    %60 = vset.pattern.permute.xlu0 0
    %61 = vperm.xlu0 %60, %v31
    %v62 = vpop.permute.xlu0 %61
    %65 = vset.pattern.permute.xlu0 0
    %66 = vperm.xlu0 %65, %v32
    %v67 = vpop.permute.xlu0 %66
    %70 = vset.pattern.permute.xlu0 0
    %71 = vperm.xlu0 %70, %v33
    %v72 = vpop.permute.xlu0 %71
    %75 = vset.pattern.permute.xlu0 0
    %76 = vperm.xlu0 %75, %v34
    %v77 = vpop.permute.xlu0 %76
    %80 = vset.pattern.permute.xlu0 0
    %81 = vperm.xlu0 %80, %v35
    %v82 = vpop.permute.xlu0 %81
    %85 = vset.pattern.permute.xlu0 0
    %86 = vperm.xlu0 %85, %v36
    %v87 = vpop.permute.xlu0 %86
    %90 = vset.pattern.permute.xlu0 0
    %91 = vperm.xlu0 %90, %v37
    %v92 = vpop.permute.xlu0 %91
    %95 = vset.pattern.permute.xlu0 0
    %96 = vperm.xlu0 %95, %v38
    %v97 = vpop.permute.xlu0 %96
    %100 = vset.pattern.permute.xlu0 0
    %101 = vperm.xlu0 %100, %v39
    %v102 = vpop.permute.xlu0 %101
    %105 = vset.pattern.permute.xlu0 0
    %106 = vperm.xlu0 %105, %v40
    %v107 = vpop.permute.xlu0 %106
    %110 = vset.pattern.permute.xlu0 0
    %111 = vperm.xlu0 %110, %v41
    %v112 = vpop.permute.xlu0 %111
    %115 = vset.pattern.permute.xlu0 0
    %116 = vperm.xlu0 %115, %v42
    %v117 = vpop.permute.xlu0 %116
    %120 = vset.pattern.permute.xlu0 0
    %121 = vperm.xlu0 %120, %v43
    %v122 = vpop.permute.xlu0 %121
    %v124 = vlaneseq
    %v125 = vshrl.u32 %v124, 7
    %v126 = vsub.s32 0, %v125
    %v127 = vrot.slane %v27, %v126
    %v128 = vmul.f32 %v47, %v127
    %v129 = vmul.f32 %v52, %v127
    %v130 = vmul.f32 %v57, %v127
    %v131 = vmul.f32 %v62, %v127
    %v132 = vmul.f32 %v67, %v127
    %v133 = vmul.f32 %v72, %v127
    %v134 = vmul.f32 %v77, %v127
    %v135 = vmul.f32 %v82, %v127
    %v136 = vmul.f32 %v87, %v127
    %v137 = vmul.f32 %v92, %v127
    %v138 = vmul.f32 %v97, %v127
    %v139 = vmul.f32 %v102, %v127
    %v140 = vmul.f32 %v107, %v127
    %v141 = vmul.f32 %v112, %v127
    %v142 = vmul.f32 %v117, %v127
    %v143 = vmul.f32 %v122, %v127
    %144 = vset.pattern.permute.xlu0 1
    %145 = vperm.xlu0 %144, %v28
    %v146 = vpop.permute.xlu0 %145
    %148 = vset.pattern.permute.xlu0 1
    %149 = vperm.xlu0 %148, %v29
    %v150 = vpop.permute.xlu0 %149
    %152 = vset.pattern.permute.xlu0 1
    %153 = vperm.xlu0 %152, %v30
    %v154 = vpop.permute.xlu0 %153
    %156 = vset.pattern.permute.xlu0 1
    %157 = vperm.xlu0 %156, %v31
    %v158 = vpop.permute.xlu0 %157
    %160 = vset.pattern.permute.xlu0 1
    %161 = vperm.xlu0 %160, %v32
    %v162 = vpop.permute.xlu0 %161
    %164 = vset.pattern.permute.xlu0 1
    %165 = vperm.xlu0 %164, %v33
    %v166 = vpop.permute.xlu0 %165
    %168 = vset.pattern.permute.xlu0 1
    %169 = vperm.xlu0 %168, %v34
    %v170 = vpop.permute.xlu0 %169
    %172 = vset.pattern.permute.xlu0 1
    %173 = vperm.xlu0 %172, %v35
    %v174 = vpop.permute.xlu0 %173
    %176 = vset.pattern.permute.xlu0 1
    %177 = vperm.xlu0 %176, %v36
    %v178 = vpop.permute.xlu0 %177
    %180 = vset.pattern.permute.xlu0 1
    %181 = vperm.xlu0 %180, %v37
    %v182 = vpop.permute.xlu0 %181
    %184 = vset.pattern.permute.xlu0 1
    %185 = vperm.xlu0 %184, %v38
    %v186 = vpop.permute.xlu0 %185
    %188 = vset.pattern.permute.xlu0 1
    %189 = vperm.xlu0 %188, %v39
    %v190 = vpop.permute.xlu0 %189
    %192 = vset.pattern.permute.xlu0 1
    %193 = vperm.xlu0 %192, %v40
    %v194 = vpop.permute.xlu0 %193
    %196 = vset.pattern.permute.xlu0 1
    %197 = vperm.xlu0 %196, %v41
    %v198 = vpop.permute.xlu0 %197
    %200 = vset.pattern.permute.xlu0 1
    %201 = vperm.xlu0 %200, %v42
    %v202 = vpop.permute.xlu0 %201
    %204 = vset.pattern.permute.xlu0 1
    %205 = vperm.xlu0 %204, %v43
    %v206 = vpop.permute.xlu0 %205
    %v208 = vlaneseq
    %v209 = vshrl.u32 %v208, 7
    %v210 = vsub.s32 1, %v209
    %v211 = vrot.slane %v27, %v210
    %v212 = vmul.f32 %v146, %v211
    %v213 = vmul.f32 %v150, %v211
    %v214 = vmul.f32 %v154, %v211
    %v215 = vmul.f32 %v158, %v211
    %v216 = vmul.f32 %v162, %v211
    %v217 = vmul.f32 %v166, %v211
    %v218 = vmul.f32 %v170, %v211
    %v219 = vmul.f32 %v174, %v211
    %v220 = vmul.f32 %v178, %v211
    %v221 = vmul.f32 %v182, %v211
    %v222 = vmul.f32 %v186, %v211
    %v223 = vmul.f32 %v190, %v211
    %v224 = vmul.f32 %v194, %v211
    %v225 = vmul.f32 %v198, %v211
    %v226 = vmul.f32 %v202, %v211
    %v227 = vmul.f32 %v206, %v211
    %v228 = vadd.f32 %v128, %v212
    %v229 = vadd.f32 %v129, %v213
    %v230 = vadd.f32 %v130, %v214
    %v231 = vadd.f32 %v131, %v215
    %v232 = vadd.f32 %v132, %v216
    %v233 = vadd.f32 %v133, %v217
    %v234 = vadd.f32 %v134, %v218
    %v235 = vadd.f32 %v135, %v219
    %v236 = vadd.f32 %v136, %v220
    %v237 = vadd.f32 %v137, %v221
    %v238 = vadd.f32 %v138, %v222
    %v239 = vadd.f32 %v139, %v223
    %v240 = vadd.f32 %v140, %v224
    %v241 = vadd.f32 %v141, %v225
    %v242 = vadd.f32 %v142, %v226
    %v243 = vadd.f32 %v143, %v227
    %244 = vset.pattern.permute.xlu0 2
    %245 = vperm.xlu0 %244, %v28
    %v246 = vpop.permute.xlu0 %245
    %248 = vset.pattern.permute.xlu0 2
    %249 = vperm.xlu0 %248, %v29
    %v250 = vpop.permute.xlu0 %249
    %252 = vset.pattern.permute.xlu0 2
    %253 = vperm.xlu0 %252, %v30
    %v254 = vpop.permute.xlu0 %253
    %256 = vset.pattern.permute.xlu0 2
    %257 = vperm.xlu0 %256, %v31
    %v258 = vpop.permute.xlu0 %257
    %260 = vset.pattern.permute.xlu0 2
    %261 = vperm.xlu0 %260, %v32
    %v262 = vpop.permute.xlu0 %261
    %264 = vset.pattern.permute.xlu0 2
    %265 = vperm.xlu0 %264, %v33
    %v266 = vpop.permute.xlu0 %265
    %268 = vset.pattern.permute.xlu0 2
    %269 = vperm.xlu0 %268, %v34
    %v270 = vpop.permute.xlu0 %269
    %272 = vset.pattern.permute.xlu0 2
    %273 = vperm.xlu0 %272, %v35
    %v274 = vpop.permute.xlu0 %273
    %276 = vset.pattern.permute.xlu0 2
    %277 = vperm.xlu0 %276, %v36
    %v278 = vpop.permute.xlu0 %277
    %280 = vset.pattern.permute.xlu0 2
    %281 = vperm.xlu0 %280, %v37
    %v282 = vpop.permute.xlu0 %281
    %284 = vset.pattern.permute.xlu0 2
    %285 = vperm.xlu0 %284, %v38
    %v286 = vpop.permute.xlu0 %285
    %288 = vset.pattern.permute.xlu0 2
    %289 = vperm.xlu0 %288, %v39
    %v290 = vpop.permute.xlu0 %289
    %292 = vset.pattern.permute.xlu0 2
    %293 = vperm.xlu0 %292, %v40
    %v294 = vpop.permute.xlu0 %293
    %296 = vset.pattern.permute.xlu0 2
    %297 = vperm.xlu0 %296, %v41
    %v298 = vpop.permute.xlu0 %297
    %300 = vset.pattern.permute.xlu0 2
    %301 = vperm.xlu0 %300, %v42
    %v302 = vpop.permute.xlu0 %301
    %304 = vset.pattern.permute.xlu0 2
    %305 = vperm.xlu0 %304, %v43
    %v306 = vpop.permute.xlu0 %305
    %v308 = vlaneseq
    %v309 = vshrl.u32 %v308, 7
    %v310 = vsub.s32 2, %v309
    %v311 = vrot.slane %v27, %v310
    %v312 = vmul.f32 %v246, %v311
    %v313 = vmul.f32 %v250, %v311
    %v314 = vmul.f32 %v254, %v311
    %v315 = vmul.f32 %v258, %v311
    %v316 = vmul.f32 %v262, %v311
    %v317 = vmul.f32 %v266, %v311
    %v318 = vmul.f32 %v270, %v311
    %v319 = vmul.f32 %v274, %v311
    %v320 = vmul.f32 %v278, %v311
    %v321 = vmul.f32 %v282, %v311
    %v322 = vmul.f32 %v286, %v311
    %v323 = vmul.f32 %v290, %v311
    %v324 = vmul.f32 %v294, %v311
    %v325 = vmul.f32 %v298, %v311
    %v326 = vmul.f32 %v302, %v311
    %v327 = vmul.f32 %v306, %v311
    %v328 = vadd.f32 %v228, %v312
    %v329 = vadd.f32 %v229, %v313
    %v330 = vadd.f32 %v230, %v314
    %v331 = vadd.f32 %v231, %v315
    %v332 = vadd.f32 %v232, %v316
    %v333 = vadd.f32 %v233, %v317
    %v334 = vadd.f32 %v234, %v318
    %v335 = vadd.f32 %v235, %v319
    %v336 = vadd.f32 %v236, %v320
    %v337 = vadd.f32 %v237, %v321
    %v338 = vadd.f32 %v238, %v322
    %v339 = vadd.f32 %v239, %v323
    %v340 = vadd.f32 %v240, %v324
    %v341 = vadd.f32 %v241, %v325
    %v342 = vadd.f32 %v242, %v326
    %v343 = vadd.f32 %v243, %v327
    %v344 = vld [vmem:[%s2] sm:$0xff]
    %v345 = vld [vmem:[%s2 + $0x8] sm:$0xff]
    %v346 = vld [vmem:[%s2 + $0x10] sm:$0xff]
    %v347 = vld [vmem:[%s2 + $0x18] sm:$0xff]
    %v348 = vld [vmem:[%s2 + $0x20] sm:$0xff]
    %v349 = vld [vmem:[%s2 + $0x28] sm:$0xff]
    %v350 = vld [vmem:[%s2 + $0x30] sm:$0xff]
    %v351 = vld [vmem:[%s2 + $0x38] sm:$0xff]
    %v352 = vld [vmem:[%s2 + $0x40] sm:$0xff]
    %v353 = vld [vmem:[%s2 + $0x48] sm:$0xff]
    %v354 = vld [vmem:[%s2 + $0x50] sm:$0xff]
    %v355 = vld [vmem:[%s2 + $0x58] sm:$0xff]
    %v356 = vld [vmem:[%s2 + $0x60] sm:$0xff]
    %v357 = vld [vmem:[%s2 + $0x68] sm:$0xff]
    %v358 = vld [vmem:[%s2 + $0x70] sm:$0xff]
    %v359 = vld [vmem:[%s2 + $0x78] sm:$0xff]
    %361 = vset.pattern.permute.xlu0 0
    %362 = vperm.xlu0 %361, %v344
    %v363 = vpop.permute.xlu0 %362
    %366 = vset.pattern.permute.xlu0 0
    %367 = vperm.xlu0 %366, %v345
    %v368 = vpop.permute.xlu0 %367
    %371 = vset.pattern.permute.xlu0 0
    %372 = vperm.xlu0 %371, %v346
    %v373 = vpop.permute.xlu0 %372
    %376 = vset.pattern.permute.xlu0 0
    %377 = vperm.xlu0 %376, %v347
    %v378 = vpop.permute.xlu0 %377
    %381 = vset.pattern.permute.xlu0 0
    %382 = vperm.xlu0 %381, %v348
    %v383 = vpop.permute.xlu0 %382
    %386 = vset.pattern.permute.xlu0 0
    %387 = vperm.xlu0 %386, %v349
    %v388 = vpop.permute.xlu0 %387
    %391 = vset.pattern.permute.xlu0 0
    %392 = vperm.xlu0 %391, %v350
    %v393 = vpop.permute.xlu0 %392
    %396 = vset.pattern.permute.xlu0 0
    %397 = vperm.xlu0 %396, %v351
    %v398 = vpop.permute.xlu0 %397
    %401 = vset.pattern.permute.xlu0 0
    %402 = vperm.xlu0 %401, %v352
    %v403 = vpop.permute.xlu0 %402
    %406 = vset.pattern.permute.xlu0 0
    %407 = vperm.xlu0 %406, %v353
    %v408 = vpop.permute.xlu0 %407
    %411 = vset.pattern.permute.xlu0 0
    %412 = vperm.xlu0 %411, %v354
    %v413 = vpop.permute.xlu0 %412
    %416 = vset.pattern.permute.xlu0 0
    %417 = vperm.xlu0 %416, %v355
    %v418 = vpop.permute.xlu0 %417
    %421 = vset.pattern.permute.xlu0 0
    %422 = vperm.xlu0 %421, %v356
    %v423 = vpop.permute.xlu0 %422
    %426 = vset.pattern.permute.xlu0 0
    %427 = vperm.xlu0 %426, %v357
    %v428 = vpop.permute.xlu0 %427
    %431 = vset.pattern.permute.xlu0 0
    %432 = vperm.xlu0 %431, %v358
    %v433 = vpop.permute.xlu0 %432
    %436 = vset.pattern.permute.xlu0 0
    %437 = vperm.xlu0 %436, %v359
    %v438 = vpop.permute.xlu0 %437
    %v440 = vadd.f32 %v328, %v363
    %v441 = vadd.f32 %v329, %v368
    %v442 = vadd.f32 %v330, %v373
    %v443 = vadd.f32 %v331, %v378
    %v444 = vadd.f32 %v332, %v383
    %v445 = vadd.f32 %v333, %v388
    %v446 = vadd.f32 %v334, %v393
    %v447 = vadd.f32 %v335, %v398
    %v448 = vadd.f32 %v336, %v403
    %v449 = vadd.f32 %v337, %v408
    %v450 = vadd.f32 %v338, %v413
    %v451 = vadd.f32 %v339, %v418
    %v452 = vadd.f32 %v340, %v423
    %v453 = vadd.f32 %v341, %v428
    %v454 = vadd.f32 %v342, %v433
    %v455 = vadd.f32 %v343, %v438
    %v456 = vmax.f32 %v440, 0.0
    %v457 = vmax.f32 %v441, 0.0
    %v458 = vmax.f32 %v442, 0.0
    %v459 = vmax.f32 %v443, 0.0
    %v460 = vmax.f32 %v444, 0.0
    %v461 = vmax.f32 %v445, 0.0
    %v462 = vmax.f32 %v446, 0.0
    %v463 = vmax.f32 %v447, 0.0
    %v464 = vmax.f32 %v448, 0.0
    %v465 = vmax.f32 %v449, 0.0
    %v466 = vmax.f32 %v450, 0.0
    %v467 = vmax.f32 %v451, 0.0
    %v468 = vmax.f32 %v452, 0.0
    %v469 = vmax.f32 %v453, 0.0
    %v470 = vmax.f32 %v454, 0.0
    %v471 = vmax.f32 %v455, 0.0
    %v472 = vld [vmem:[%s3] sm:$0xff]
    %v473 = vld [vmem:[%s3 + $0x8] sm:$0xff]
    %v474 = vld [vmem:[%s3 + $0x10] sm:$0xff]
    %v475 = vld [vmem:[%s3 + $0x18] sm:$0xff]
    %v476 = vld [vmem:[%s3 + $0x20] sm:$0xff]
    %v477 = vld [vmem:[%s3 + $0x28] sm:$0xff]
    %v478 = vld [vmem:[%s3 + $0x30] sm:$0xff]
    %v479 = vld [vmem:[%s3 + $0x38] sm:$0xff]
    %v480 = vld [vmem:[%s3 + $0x40] sm:$0xff]
    %v481 = vld [vmem:[%s3 + $0x48] sm:$0xff]
    %v482 = vld [vmem:[%s3 + $0x50] sm:$0xff]
    %v483 = vld [vmem:[%s3 + $0x58] sm:$0xff]
    %v484 = vld [vmem:[%s3 + $0x60] sm:$0xff]
    %v485 = vld [vmem:[%s3 + $0x68] sm:$0xff]
    %v486 = vld [vmem:[%s3 + $0x70] sm:$0xff]
    %v487 = vld [vmem:[%s3 + $0x78] sm:$0xff]
    %v488 = vld [vmem:[%s4] sm:$0xff]
    %v489 = vld [vmem:[%s4 + $0x8] sm:$0xff]
    %v490 = vld [vmem:[%s4 + $0x10] sm:$0xff]
    %v491 = vld [vmem:[%s4 + $0x18] sm:$0xff]
    %v492 = vld [vmem:[%s4 + $0x20] sm:$0xff]
    %v493 = vld [vmem:[%s4 + $0x28] sm:$0xff]
    %v494 = vld [vmem:[%s4 + $0x30] sm:$0xff]
    %v495 = vld [vmem:[%s4 + $0x38] sm:$0xff]
    %v496 = vld [vmem:[%s4 + $0x40] sm:$0xff]
    %v497 = vld [vmem:[%s4 + $0x48] sm:$0xff]
    %v498 = vld [vmem:[%s4 + $0x50] sm:$0xff]
    %v499 = vld [vmem:[%s4 + $0x58] sm:$0xff]
    %v500 = vld [vmem:[%s4 + $0x60] sm:$0xff]
    %v501 = vld [vmem:[%s4 + $0x68] sm:$0xff]
    %v502 = vld [vmem:[%s4 + $0x70] sm:$0xff]
    %v503 = vld [vmem:[%s4 + $0x78] sm:$0xff]
    %505 = vset.pattern.permute.xlu0 0
    %506 = vperm.xlu0 %505, %v488
    %v507 = vpop.permute.xlu0 %506
    %510 = vset.pattern.permute.xlu0 0
    %511 = vperm.xlu0 %510, %v489
    %v512 = vpop.permute.xlu0 %511
    %515 = vset.pattern.permute.xlu0 0
    %516 = vperm.xlu0 %515, %v490
    %v517 = vpop.permute.xlu0 %516
    %520 = vset.pattern.permute.xlu0 0
    %521 = vperm.xlu0 %520, %v491
    %v522 = vpop.permute.xlu0 %521
    %525 = vset.pattern.permute.xlu0 0
    %526 = vperm.xlu0 %525, %v492
    %v527 = vpop.permute.xlu0 %526
    %530 = vset.pattern.permute.xlu0 0
    %531 = vperm.xlu0 %530, %v493
    %v532 = vpop.permute.xlu0 %531
    %535 = vset.pattern.permute.xlu0 0
    %536 = vperm.xlu0 %535, %v494
    %v537 = vpop.permute.xlu0 %536
    %540 = vset.pattern.permute.xlu0 0
    %541 = vperm.xlu0 %540, %v495
    %v542 = vpop.permute.xlu0 %541
    %545 = vset.pattern.permute.xlu0 0
    %546 = vperm.xlu0 %545, %v496
    %v547 = vpop.permute.xlu0 %546
    %550 = vset.pattern.permute.xlu0 0
    %551 = vperm.xlu0 %550, %v497
    %v552 = vpop.permute.xlu0 %551
    %555 = vset.pattern.permute.xlu0 0
    %556 = vperm.xlu0 %555, %v498
    %v557 = vpop.permute.xlu0 %556
    %560 = vset.pattern.permute.xlu0 0
    %561 = vperm.xlu0 %560, %v499
    %v562 = vpop.permute.xlu0 %561
    %565 = vset.pattern.permute.xlu0 0
    %566 = vperm.xlu0 %565, %v500
    %v567 = vpop.permute.xlu0 %566
    %570 = vset.pattern.permute.xlu0 0
    %571 = vperm.xlu0 %570, %v501
    %v572 = vpop.permute.xlu0 %571
    %575 = vset.pattern.permute.xlu0 0
    %576 = vperm.xlu0 %575, %v502
    %v577 = vpop.permute.xlu0 %576
    %580 = vset.pattern.permute.xlu0 0
    %581 = vperm.xlu0 %580, %v503
    %v582 = vpop.permute.xlu0 %581
    %584 = vmatprep.subr.mxu0 0.0
    %585 = vmatpush1.msra.mxu0 %v456
    %586 = vmatprep.subr.mxu0 0.0
    %587 = vmatpush1.msra.mxu0 %v457
    %588 = vmatprep.subr.mxu0 0.0
    %589 = vmatpush1.msra.mxu0 %v458
    %590 = vmatprep.subr.mxu0 0.0
    %591 = vmatpush1.msra.mxu0 %v459
    %592 = vmatprep.subr.mxu0 0.0
    %593 = vmatpush1.msra.mxu0 %v460
    %594 = vmatprep.subr.mxu0 0.0
    %595 = vmatpush1.msra.mxu0 %v461
    %596 = vmatprep.subr.mxu0 0.0
    %597 = vmatpush1.msra.mxu0 %v462
    %598 = vmatprep.subr.mxu0 0.0
    %599 = vmatpush1.msra.mxu0 %v463
    %600 = vmatprep.subr.mxu0 0.0
    %601 = vmatpush1.msra.mxu0 %v464
    %602 = vmatprep.subr.mxu0 0.0
    %603 = vmatpush1.msra.mxu0 %v465
    %604 = vmatprep.subr.mxu0 0.0
    %605 = vmatpush1.msra.mxu0 %v466
    %606 = vmatprep.subr.mxu0 0.0
    %607 = vmatpush1.msra.mxu0 %v467
    %608 = vmatprep.subr.mxu0 0.0
    %609 = vmatpush1.msra.mxu0 %v468
    %610 = vmatprep.subr.mxu0 0.0
    %611 = vmatpush1.msra.mxu0 %v469
    %612 = vmatprep.subr.mxu0 0.0
    %613 = vmatpush1.msra.mxu0 %v470
    %614 = vmatprep.subr.mxu0 0.0
    %615 = vmatpush1.msra.mxu0 %v471
    %616 = vmatprep.subr.mxu0 0.0
    %617 = vmatpush1.msra.mxu0 0.0
    %618 = vmatprep.subr.mxu0 0.0
    %619 = vmatpush1.msra.mxu0 0.0
    %620 = vmatprep.subr.mxu0 0.0
    %621 = vmatpush1.msra.mxu0 0.0
    %622 = vmatprep.subr.mxu0 0.0
    %623 = vmatpush1.msra.mxu0 0.0
    %624 = vmatprep.subr.mxu0 0.0
    %625 = vmatpush1.msra.mxu0 0.0
    %626 = vmatprep.subr.mxu0 0.0
    %627 = vmatpush1.msra.mxu0 0.0
    %628 = vmatprep.subr.mxu0 0.0
    %629 = vmatpush1.msra.mxu0 0.0
    %630 = vmatprep.subr.mxu0 0.0
    %631 = vmatpush1.msra.mxu0 0.0
    %632 = vmatprep.subr.mxu0 0.0
    %633 = vmatpush1.msra.mxu0 0.0
    %634 = vmatprep.subr.mxu0 0.0
    %635 = vmatpush1.msra.mxu0 0.0
    %636 = vmatprep.subr.mxu0 0.0
    %637 = vmatpush1.msra.mxu0 0.0
    %638 = vmatprep.subr.mxu0 0.0
    %639 = vmatpush1.msra.mxu0 0.0
    %640 = vmatprep.subr.mxu0 0.0
    %641 = vmatpush1.msra.mxu0 0.0
    %642 = vmatprep.subr.mxu0 0.0
    %643 = vmatpush1.msra.mxu0 0.0
    %644 = vmatprep.subr.mxu0 0.0
    %645 = vmatpush1.msra.mxu0 0.0
    %646 = vmatprep.subr.mxu0 0.0
    %647 = vmatpush1.msra.mxu0 0.0
    %648 = vmatprep.mubr.f32.mxu0 0.0
    %649 = vmatmul.mubr.f32.gmra.mrb[0].mxu0 %v472
    %v650 = vpop.f32.mrb[0].mxu0
    %v651 = vadd.f32 %v507, %v650
    %v652 = vpop.f32.mrb[0].mxu0
    %653 = vmatprep.mubr.f32.mxu0 0.0
    %654 = vmatmul.mubr.f32.gmra.mrb[0].mxu0 %v473
    %v655 = vpop.f32.mrb[0].mxu0
    %v656 = vadd.f32 %v512, %v655
    %v657 = vpop.f32.mrb[0].mxu0
    %658 = vmatprep.mubr.f32.mxu0 0.0
    %659 = vmatmul.mubr.f32.gmra.mrb[0].mxu0 %v474
    %v660 = vpop.f32.mrb[0].mxu0
    %v661 = vadd.f32 %v517, %v660
    %v662 = vpop.f32.mrb[0].mxu0
    %663 = vmatprep.mubr.f32.mxu0 0.0
    %664 = vmatmul.mubr.f32.gmra.mrb[0].mxu0 %v475
    %v665 = vpop.f32.mrb[0].mxu0
    %v666 = vadd.f32 %v522, %v665
    %v667 = vpop.f32.mrb[0].mxu0
    %668 = vmatprep.mubr.f32.mxu0 0.0
    %669 = vmatmul.mubr.f32.gmra.mrb[0].mxu0 %v476
    %v670 = vpop.f32.mrb[0].mxu0
    %v671 = vadd.f32 %v527, %v670
    %v672 = vpop.f32.mrb[0].mxu0
    %673 = vmatprep.mubr.f32.mxu0 0.0
    %674 = vmatmul.mubr.f32.gmra.mrb[0].mxu0 %v477
    %v675 = vpop.f32.mrb[0].mxu0
    %v676 = vadd.f32 %v532, %v675
    %v677 = vpop.f32.mrb[0].mxu0
    %678 = vmatprep.mubr.f32.mxu0 0.0
    %679 = vmatmul.mubr.f32.gmra.mrb[0].mxu0 %v478
    %v680 = vpop.f32.mrb[0].mxu0
    %v681 = vadd.f32 %v537, %v680
    %v682 = vpop.f32.mrb[0].mxu0
    %683 = vmatprep.mubr.f32.mxu0 0.0
    %684 = vmatmul.mubr.f32.gmra.mrb[0].mxu0 %v479
    %v685 = vpop.f32.mrb[0].mxu0
    %v686 = vadd.f32 %v542, %v685
    %v687 = vpop.f32.mrb[0].mxu0
    %688 = vmatprep.mubr.f32.mxu0 0.0
    %689 = vmatmul.mubr.f32.gmra.mrb[0].mxu0 %v480
    %v690 = vpop.f32.mrb[0].mxu0
    %v691 = vadd.f32 %v547, %v690
    %v692 = vpop.f32.mrb[0].mxu0
    %693 = vmatprep.mubr.f32.mxu0 0.0
    %694 = vmatmul.mubr.f32.gmra.mrb[0].mxu0 %v481
    %v695 = vpop.f32.mrb[0].mxu0
    %v696 = vadd.f32 %v552, %v695
    %v697 = vpop.f32.mrb[0].mxu0
    %698 = vmatprep.mubr.f32.mxu0 0.0
    %699 = vmatmul.mubr.f32.gmra.mrb[0].mxu0 %v482
    %v700 = vpop.f32.mrb[0].mxu0
    %v701 = vadd.f32 %v557, %v700
    %v702 = vpop.f32.mrb[0].mxu0
    %703 = vmatprep.mubr.f32.mxu0 0.0
    %704 = vmatmul.mubr.f32.gmra.mrb[0].mxu0 %v483
    %v705 = vpop.f32.mrb[0].mxu0
    %v706 = vadd.f32 %v562, %v705
    %v707 = vpop.f32.mrb[0].mxu0
    %708 = vmatprep.mubr.f32.mxu0 0.0
    %709 = vmatmul.mubr.f32.gmra.mrb[0].mxu0 %v484
    %v710 = vpop.f32.mrb[0].mxu0
    %v711 = vadd.f32 %v567, %v710
    %v712 = vpop.f32.mrb[0].mxu0
    %713 = vmatprep.mubr.f32.mxu0 0.0
    %714 = vmatmul.mubr.f32.gmra.mrb[0].mxu0 %v485
    %v715 = vpop.f32.mrb[0].mxu0
    %v716 = vadd.f32 %v572, %v715
    %v717 = vpop.f32.mrb[0].mxu0
    %718 = vmatprep.mubr.f32.mxu0 0.0
    %719 = vmatmul.mubr.f32.gmra.mrb[0].mxu0 %v486
    %v720 = vpop.f32.mrb[0].mxu0
    %v721 = vadd.f32 %v577, %v720
    %v722 = vpop.f32.mrb[0].mxu0
    %723 = vmatprep.mubr.f32.mxu0 0.0
    %724 = vmatmul.mubr.f32.gmra.mrb[0].mxu0 %v487
    %v725 = vpop.f32.mrb[0].mxu0
    %v726 = vadd.f32 %v582, %v725
    %v727 = vpop.f32.mrb[0].mxu0
    %728 = vdwg.mxu0
    %v729 = vmax.f32 %v651, 0.0
    %v730 = vmax.f32 %v656, 0.0
    %v731 = vmax.f32 %v661, 0.0
    %v732 = vmax.f32 %v666, 0.0
    %v733 = vmax.f32 %v671, 0.0
    %v734 = vmax.f32 %v676, 0.0
    %v735 = vmax.f32 %v681, 0.0
    %v736 = vmax.f32 %v686, 0.0
    %v737 = vmax.f32 %v691, 0.0
    %v738 = vmax.f32 %v696, 0.0
    %v739 = vmax.f32 %v701, 0.0
    %v740 = vmax.f32 %v706, 0.0
    %v741 = vmax.f32 %v711, 0.0
    %v742 = vmax.f32 %v716, 0.0
    %v743 = vmax.f32 %v721, 0.0
    %v744 = vmax.f32 %v726, 0.0
    %v745 = vld [vmem:[%s5] sm:$0xff]
    %v746 = vld [vmem:[%s5 + $0x8] sm:$0xff]
    %v747 = vld [vmem:[%s5 + $0x10] sm:$0xff]
    %v748 = vld [vmem:[%s5 + $0x18] sm:$0xff]
    %v749 = vld [vmem:[%s5 + $0x20] sm:$0xff]
    %v750 = vld [vmem:[%s5 + $0x28] sm:$0xff]
    %v751 = vld [vmem:[%s5 + $0x30] sm:$0xff]
    %v752 = vld [vmem:[%s5 + $0x38] sm:$0xff]
    %v753 = vld [vmem:[%s5 + $0x40] sm:$0xff]
    %v754 = vld [vmem:[%s5 + $0x48] sm:$0xff]
    %v755 = vld [vmem:[%s5 + $0x50] sm:$0xff]
    %v756 = vld [vmem:[%s5 + $0x58] sm:$0xff]
    %v757 = vld [vmem:[%s5 + $0x60] sm:$0xff]
    %v758 = vld [vmem:[%s5 + $0x68] sm:$0xff]
    %v759 = vld [vmem:[%s5 + $0x70] sm:$0xff]
    %v760 = vld [vmem:[%s5 + $0x78] sm:$0xff]
    %v761 = vld [vmem:[%s6] sm:$0xff]
    %v762 = vld [vmem:[%s6 + $0x8] sm:$0xff]
    %v763 = vld [vmem:[%s6 + $0x10] sm:$0xff]
    %v764 = vld [vmem:[%s6 + $0x18] sm:$0xff]
    %v765 = vld [vmem:[%s6 + $0x20] sm:$0xff]
    %v766 = vld [vmem:[%s6 + $0x28] sm:$0xff]
    %v767 = vld [vmem:[%s6 + $0x30] sm:$0xff]
    %v768 = vld [vmem:[%s6 + $0x38] sm:$0xff]
    %v769 = vld [vmem:[%s6 + $0x40] sm:$0xff]
    %v770 = vld [vmem:[%s6 + $0x48] sm:$0xff]
    %v771 = vld [vmem:[%s6 + $0x50] sm:$0xff]
    %v772 = vld [vmem:[%s6 + $0x58] sm:$0xff]
    %v773 = vld [vmem:[%s6 + $0x60] sm:$0xff]
    %v774 = vld [vmem:[%s6 + $0x68] sm:$0xff]
    %v775 = vld [vmem:[%s6 + $0x70] sm:$0xff]
    %v776 = vld [vmem:[%s6 + $0x78] sm:$0xff]
    %778 = vset.pattern.permute.xlu0 0
    %779 = vperm.xlu0 %778, %v761
    %v780 = vpop.permute.xlu0 %779
    %783 = vset.pattern.permute.xlu0 0
    %784 = vperm.xlu0 %783, %v762
    %v785 = vpop.permute.xlu0 %784
    %788 = vset.pattern.permute.xlu0 0
    %789 = vperm.xlu0 %788, %v763
    %v790 = vpop.permute.xlu0 %789
    %793 = vset.pattern.permute.xlu0 0
    %794 = vperm.xlu0 %793, %v764
    %v795 = vpop.permute.xlu0 %794
    %798 = vset.pattern.permute.xlu0 0
    %799 = vperm.xlu0 %798, %v765
    %v800 = vpop.permute.xlu0 %799
    %803 = vset.pattern.permute.xlu0 0
    %804 = vperm.xlu0 %803, %v766
    %v805 = vpop.permute.xlu0 %804
    %808 = vset.pattern.permute.xlu0 0
    %809 = vperm.xlu0 %808, %v767
    %v810 = vpop.permute.xlu0 %809
    %813 = vset.pattern.permute.xlu0 0
    %814 = vperm.xlu0 %813, %v768
    %v815 = vpop.permute.xlu0 %814
    %818 = vset.pattern.permute.xlu0 0
    %819 = vperm.xlu0 %818, %v769
    %v820 = vpop.permute.xlu0 %819
    %823 = vset.pattern.permute.xlu0 0
    %824 = vperm.xlu0 %823, %v770
    %v825 = vpop.permute.xlu0 %824
    %828 = vset.pattern.permute.xlu0 0
    %829 = vperm.xlu0 %828, %v771
    %v830 = vpop.permute.xlu0 %829
    %833 = vset.pattern.permute.xlu0 0
    %834 = vperm.xlu0 %833, %v772
    %v835 = vpop.permute.xlu0 %834
    %838 = vset.pattern.permute.xlu0 0
    %839 = vperm.xlu0 %838, %v773
    %v840 = vpop.permute.xlu0 %839
    %843 = vset.pattern.permute.xlu0 0
    %844 = vperm.xlu0 %843, %v774
    %v845 = vpop.permute.xlu0 %844
    %848 = vset.pattern.permute.xlu0 0
    %849 = vperm.xlu0 %848, %v775
    %v850 = vpop.permute.xlu0 %849
    %853 = vset.pattern.permute.xlu0 0
    %854 = vperm.xlu0 %853, %v776
    %v855 = vpop.permute.xlu0 %854
    %857 = vmatprep.subr.mxu0 0.0
    %858 = vmatpush1.msra.mxu0 %v729
    %859 = vmatprep.subr.mxu0 0.0
    %860 = vmatpush1.msra.mxu0 %v730
    %861 = vmatprep.subr.mxu0 0.0
    %862 = vmatpush1.msra.mxu0 %v731
    %863 = vmatprep.subr.mxu0 0.0
    %864 = vmatpush1.msra.mxu0 %v732
    %865 = vmatprep.subr.mxu0 0.0
    %866 = vmatpush1.msra.mxu0 %v733
    %867 = vmatprep.subr.mxu0 0.0
    %868 = vmatpush1.msra.mxu0 %v734
    %869 = vmatprep.subr.mxu0 0.0
    %870 = vmatpush1.msra.mxu0 %v735
    %871 = vmatprep.subr.mxu0 0.0
    %872 = vmatpush1.msra.mxu0 %v736
    %873 = vmatprep.subr.mxu0 0.0
    %874 = vmatpush1.msra.mxu0 %v737
    %875 = vmatprep.subr.mxu0 0.0
    %876 = vmatpush1.msra.mxu0 %v738
    %877 = vmatprep.subr.mxu0 0.0
    %878 = vmatpush1.msra.mxu0 %v739
    %879 = vmatprep.subr.mxu0 0.0
    %880 = vmatpush1.msra.mxu0 %v740
    %881 = vmatprep.subr.mxu0 0.0
    %882 = vmatpush1.msra.mxu0 %v741
    %883 = vmatprep.subr.mxu0 0.0
    %884 = vmatpush1.msra.mxu0 %v742
    %885 = vmatprep.subr.mxu0 0.0
    %886 = vmatpush1.msra.mxu0 %v743
    %887 = vmatprep.subr.mxu0 0.0
    %888 = vmatpush1.msra.mxu0 %v744
    %889 = vmatprep.subr.mxu0 0.0
    %890 = vmatpush1.msra.mxu0 0.0
    %891 = vmatprep.subr.mxu0 0.0
    %892 = vmatpush1.msra.mxu0 0.0
    %893 = vmatprep.subr.mxu0 0.0
    %894 = vmatpush1.msra.mxu0 0.0
    %895 = vmatprep.subr.mxu0 0.0
    %896 = vmatpush1.msra.mxu0 0.0
    %897 = vmatprep.subr.mxu0 0.0
    %898 = vmatpush1.msra.mxu0 0.0
    %899 = vmatprep.subr.mxu0 0.0
    %900 = vmatpush1.msra.mxu0 0.0
    %901 = vmatprep.subr.mxu0 0.0
    %902 = vmatpush1.msra.mxu0 0.0
    %903 = vmatprep.subr.mxu0 0.0
    %904 = vmatpush1.msra.mxu0 0.0
    %905 = vmatprep.subr.mxu0 0.0
    %906 = vmatpush1.msra.mxu0 0.0
    %907 = vmatprep.subr.mxu0 0.0
    %908 = vmatpush1.msra.mxu0 0.0
    %909 = vmatprep.subr.mxu0 0.0
    %910 = vmatpush1.msra.mxu0 0.0
    %911 = vmatprep.subr.mxu0 0.0
    %912 = vmatpush1.msra.mxu0 0.0
    %913 = vmatprep.subr.mxu0 0.0
    %914 = vmatpush1.msra.mxu0 0.0
    %915 = vmatprep.subr.mxu0 0.0
    %916 = vmatpush1.msra.mxu0 0.0
    %917 = vmatprep.subr.mxu0 0.0
    %918 = vmatpush1.msra.mxu0 0.0
    %919 = vmatprep.subr.mxu0 0.0
    %920 = vmatpush1.msra.mxu0 0.0
    %921 = vmatprep.mubr.f32.mxu0 0.0
    %922 = vmatmul.mubr.f32.gmra.mrb[0].mxu0 %v745
    %v923 = vpop.f32.mrb[0].mxu0
    %v924 = vadd.f32 %v780, %v923
    %v925 = vpop.f32.mrb[0].mxu0
    %926 = vmatprep.mubr.f32.mxu0 0.0
    %927 = vmatmul.mubr.f32.gmra.mrb[0].mxu0 %v746
    %v928 = vpop.f32.mrb[0].mxu0
    %v929 = vadd.f32 %v785, %v928
    %v930 = vpop.f32.mrb[0].mxu0
    %931 = vmatprep.mubr.f32.mxu0 0.0
    %932 = vmatmul.mubr.f32.gmra.mrb[0].mxu0 %v747
    %v933 = vpop.f32.mrb[0].mxu0
    %v934 = vadd.f32 %v790, %v933
    %v935 = vpop.f32.mrb[0].mxu0
    %936 = vmatprep.mubr.f32.mxu0 0.0
    %937 = vmatmul.mubr.f32.gmra.mrb[0].mxu0 %v748
    %v938 = vpop.f32.mrb[0].mxu0
    %v939 = vadd.f32 %v795, %v938
    %v940 = vpop.f32.mrb[0].mxu0
    %941 = vmatprep.mubr.f32.mxu0 0.0
    %942 = vmatmul.mubr.f32.gmra.mrb[0].mxu0 %v749
    %v943 = vpop.f32.mrb[0].mxu0
    %v944 = vadd.f32 %v800, %v943
    %v945 = vpop.f32.mrb[0].mxu0
    %946 = vmatprep.mubr.f32.mxu0 0.0
    %947 = vmatmul.mubr.f32.gmra.mrb[0].mxu0 %v750
    %v948 = vpop.f32.mrb[0].mxu0
    %v949 = vadd.f32 %v805, %v948
    %v950 = vpop.f32.mrb[0].mxu0
    %951 = vmatprep.mubr.f32.mxu0 0.0
    %952 = vmatmul.mubr.f32.gmra.mrb[0].mxu0 %v751
    %v953 = vpop.f32.mrb[0].mxu0
    %v954 = vadd.f32 %v810, %v953
    %v955 = vpop.f32.mrb[0].mxu0
    %956 = vmatprep.mubr.f32.mxu0 0.0
    %957 = vmatmul.mubr.f32.gmra.mrb[0].mxu0 %v752
    %v958 = vpop.f32.mrb[0].mxu0
    %v959 = vadd.f32 %v815, %v958
    %v960 = vpop.f32.mrb[0].mxu0
    %961 = vmatprep.mubr.f32.mxu0 0.0
    %962 = vmatmul.mubr.f32.gmra.mrb[0].mxu0 %v753
    %v963 = vpop.f32.mrb[0].mxu0
    %v964 = vadd.f32 %v820, %v963
    %v965 = vpop.f32.mrb[0].mxu0
    %966 = vmatprep.mubr.f32.mxu0 0.0
    %967 = vmatmul.mubr.f32.gmra.mrb[0].mxu0 %v754
    %v968 = vpop.f32.mrb[0].mxu0
    %v969 = vadd.f32 %v825, %v968
    %v970 = vpop.f32.mrb[0].mxu0
    %971 = vmatprep.mubr.f32.mxu0 0.0
    %972 = vmatmul.mubr.f32.gmra.mrb[0].mxu0 %v755
    %v973 = vpop.f32.mrb[0].mxu0
    %v974 = vadd.f32 %v830, %v973
    %v975 = vpop.f32.mrb[0].mxu0
    %976 = vmatprep.mubr.f32.mxu0 0.0
    %977 = vmatmul.mubr.f32.gmra.mrb[0].mxu0 %v756
    %v978 = vpop.f32.mrb[0].mxu0
    %v979 = vadd.f32 %v835, %v978
    %v980 = vpop.f32.mrb[0].mxu0
    %981 = vmatprep.mubr.f32.mxu0 0.0
    %982 = vmatmul.mubr.f32.gmra.mrb[0].mxu0 %v757
    %v983 = vpop.f32.mrb[0].mxu0
    %v984 = vadd.f32 %v840, %v983
    %v985 = vpop.f32.mrb[0].mxu0
    %986 = vmatprep.mubr.f32.mxu0 0.0
    %987 = vmatmul.mubr.f32.gmra.mrb[0].mxu0 %v758
    %v988 = vpop.f32.mrb[0].mxu0
    %v989 = vadd.f32 %v845, %v988
    %v990 = vpop.f32.mrb[0].mxu0
    %991 = vmatprep.mubr.f32.mxu0 0.0
    %992 = vmatmul.mubr.f32.gmra.mrb[0].mxu0 %v759
    %v993 = vpop.f32.mrb[0].mxu0
    %v994 = vadd.f32 %v850, %v993
    %v995 = vpop.f32.mrb[0].mxu0
    %996 = vmatprep.mubr.f32.mxu0 0.0
    %997 = vmatmul.mubr.f32.gmra.mrb[0].mxu0 %v760
    %v998 = vpop.f32.mrb[0].mxu0
    %v999 = vadd.f32 %v855, %v998
    %v1000 = vpop.f32.mrb[0].mxu0
    %1001 = vdwg.mxu0
    %1002 = vst [vmem:[#allocation2] sm:$0xff] %v924
    %1003 = vst [vmem:[#allocation2 + $0x8] sm:$0xff] %v929
    %1004 = vst [vmem:[#allocation2 + $0x10] sm:$0xff] %v934
    %1005 = vst [vmem:[#allocation2 + $0x18] sm:$0xff] %v939
    %1006 = vst [vmem:[#allocation2 + $0x20] sm:$0xff] %v944
    %1007 = vst [vmem:[#allocation2 + $0x28] sm:$0xff] %v949
    %1008 = vst [vmem:[#allocation2 + $0x30] sm:$0xff] %v954
    %1009 = vst [vmem:[#allocation2 + $0x38] sm:$0xff] %v959
    %1010 = vst [vmem:[#allocation2 + $0x40] sm:$0xff] %v964
    %1011 = vst [vmem:[#allocation2 + $0x48] sm:$0xff] %v969
    %1012 = vst [vmem:[#allocation2 + $0x50] sm:$0xff] %v974
    %1013 = vst [vmem:[#allocation2 + $0x58] sm:$0xff] %v979
    %1014 = vst [vmem:[#allocation2 + $0x60] sm:$0xff] %v984
    %1015 = vst [vmem:[#allocation2 + $0x68] sm:$0xff] %v989
    %1016 = vst [vmem:[#allocation2 + $0x70] sm:$0xff] %v994
    %1017 = vst [vmem:[#allocation2 + $0x78] sm:$0xff] %v999
    // Predicated region
    $region30: #{tpu_custom_call.1} parent=1 // pred_check
      _
    $region31: #{tpu_custom_call.1} parent=1 // pred_check_branch
      %1019 = sbr.rel (0) target = $region33
    $region32: #{tpu_custom_call.1} parent=1 // pred_region
      %s1021 = ssub.s32 2048, 2048
      %1022 = vsyncadd [#allocation3], %s1021
      %s1023 = sshll.u32 [#allocation2], 4
      %s1024 = int_to_ptr.vmem [resolvable:$true] %s1023
      %1029 = dma.vmem_to_hbm [thread:$0]  %s1024, 2048, %s7, [#allocation3], 128, 128, 8
    $region33: #{tpu_custom_call.1} parent=1 // pred_fallthru
      _
    // Predicated region
    $region34: #{tpu_custom_call.1} parent=1 // pred_check
      _
    $region35: #{tpu_custom_call.1} parent=1 // pred_check_branch
      %1031 = sbr.rel (0) target = $region37
    $region36: #{tpu_custom_call.1} parent=1 // pred_region
      %1032 = dma.done [#allocation3], 2048
    $region37: #{tpu_custom_call.1} parent=1 // pred_fallthru
      _
    %1033 = vsyncpa [#allocation3], 1

</llo_original>
